<compile_context>
chip_gen: v5e
topology: v5e:2x2
jax: 0.10.0
libtpu: 0.0.40
codegen_flags: <defaults>
</compile_context>

<pallas_src>
import functools
import math

import numpy as np

import jax
import jax.numpy as jnp
from jax.experimental import pallas as pl
from jax.experimental.pallas import tpu as pltpu


# ----------------------------------------------------------------------------
# Fused kernel: conv3x3 + BN(batch stats) + ReLU + bilinear-weighted global
# pool + folded 1x1 conv.  Whole batch in one grid step, all data in VMEM.
# ----------------------------------------------------------------------------
def dprior_fused_kernel(x_ref, t_ref, bc_ref, g_ref, bta_ref, pmat_ref,
                        qmat_ref, wh_ref, m_ref, b1_ref, o_ref, *,
                        n, h, cout, inv_count, eps):
    """x_ref:    (N*H, Kpad)   row-shifted, lane-concatenated padded input
                               (lane index = (kh, w+kw, cin), zero-padded).
    t_ref:    (Kpad, W*Cout)  width-folded block-Toeplitz 3x3-conv weight.
    bc_ref:   (1, W*Cout)     conv bias tiled per (w, cout) lane group.
    g_ref / bta_ref: (1, Cout)  BatchNorm gamma / beta.
    pmat_ref: (W*Cout, Cout)  lane -> channel indicator (per-channel pooling).
    qmat_ref: (Cout, W*Cout)  channel -> lane indicator (per-channel bcast).
    wh_ref:   (N*H, 1)        bilinear row-pool weights wh[h], tiled over n.
    m_ref:    (W*Cout, Cout)  column-pool weights ww folded with the 1x1 conv.
    b1_ref:   (1, Cout)       1x1-conv bias.
    o_ref:    (N, Cout)       d_prior output."""
    # 3x3 conv (+ bias) as a single MXU contraction over (kh, w+kw, cin).
    y = jnp.dot(x_ref[...], t_ref[...], preferred_element_type=jnp.float32)
    y = y + bc_ref[...]                                       # (N*H, W*Cout)

    # BatchNorm batch statistics (training mode, biased variance), two-pass:
    # center on the batch mean before squaring to avoid cancellation.
    colsum = jnp.sum(y, axis=0, keepdims=True)                # (1, W*Cout)
    mean_c = jnp.dot(colsum, pmat_ref[...],
                     preferred_element_type=jnp.float32) * inv_count   # (1, Cout)
    mean_l = jnp.dot(mean_c, qmat_ref[...],
                     preferred_element_type=jnp.float32)                # (1, W*Cout)
    yc = y - mean_l                                           # centered conv out
    var_c = jnp.dot(jnp.sum(yc * yc, axis=0, keepdims=True), pmat_ref[...],
                    preferred_element_type=jnp.float32) * inv_count     # (1, Cout)
    scale_c = g_ref[...] * jax.lax.rsqrt(var_c + eps)         # (1, Cout)
    scale_l = jnp.dot(scale_c, qmat_ref[...],
                      preferred_element_type=jnp.float32)     # (1, W*Cout)
    beta_l = jnp.dot(bta_ref[...], qmat_ref[...],
                     preferred_element_type=jnp.float32)      # (1, W*Cout)

    # BN affine + ReLU, then the bilinear row weights.
    z = jnp.maximum(yc * scale_l + beta_l, 0.0)               # (N*H, W*Cout)
    zz = z * wh_ref[...]                                      # row-weighted

    # Column pooling folded with the 1x1 conv: one (N*H, WC) @ (WC, Cout)
    # matmul, then the per-sample row sum and the 1x1-conv bias.
    pooled = jnp.dot(zz, m_ref[...], preferred_element_type=jnp.float32)
    o = jnp.sum(pooled.reshape(n, h, cout), axis=1) + b1_ref[...]       # (N, Cout)
    o_ref[...] = o.astype(o_ref.dtype)


# ----------------------------------------------------------------------------
# Host-side helpers (shape-only / weight-only constants).
# ----------------------------------------------------------------------------
def _align_corners_avg_weights(in_size, out_size):
    """w (in_size,) with mean_i(interp1d_align_corners(y)[i]) == sum_h w[h]*y[h]."""
    # TODO(synk): only validated for out_size > 1 and simple scale factors;
    # confirm PyTorch recompute_scale_factor semantics for exotic scales.
    w = np.zeros((in_size,), dtype=np.float64)
    if in_size == 1 or out_size == 1:
        w[0] = 1.0
    else:
        step = (in_size - 1) / (out_size - 1)
        for i in range(out_size):
            src = i * step
            lo = min(int(np.floor(src)), in_size - 1)
            hi = min(lo + 1, in_size - 1)
            frac = src - lo
            w[lo] += 1.0 - frac
            w[hi] += frac
        w /= out_size
    return w.astype(np.float32)


def _interp_matrix(in_size, out_size):
    """Full 1-D align_corners=True bilinear interpolation matrix (out, in)."""
    a = np.zeros((out_size, in_size), dtype=np.float64)
    if in_size == 1 or out_size == 1:
        a[:, 0] = 1.0
    else:
        step = (in_size - 1) / (out_size - 1)
        for i in range(out_size):
            src = i * step
            lo = min(int(np.floor(src)), in_size - 1)
            hi = min(lo + 1, in_size - 1)
            frac = src - lo
            a[i, lo] += 1.0 - frac
            a[i, hi] += frac
    return jnp.asarray(a, dtype=jnp.float32)


def prepare_params(w3, b3, gamma, beta, w1, b1, *, W, scale_factor):
    """Build all weight-derived kernel constants ONCE (hoisted out of the
    per-call path).  w3: (Cout, Cin, 3, 3); b3/gamma/beta/b1: (Cout,);
    w1: (Cout, Cout)."""
    Cout, Cin = int(w3.shape[0]), int(w3.shape[1])
    WC = W * Cout
    K = 3 * (W + 2) * Cin
    Kpad = ((K + 127) // 128) * 128

    # Width-folded block-Toeplitz conv weight with all three kernel rows
    # stacked along the contraction dim: row index (kh, wp, cin), col (w, cout).
    w_hwio = jnp.transpose(w3, (2, 3, 1, 0)).astype(jnp.float32)   # (3,3,Cin,Cout)
    sel = np.zeros((3, W + 2, W), dtype=np.float32)                # sel[kw, w+kw, w]
    for kw in range(3):
        for w in range(W):
            sel[kw, w + kw, w] = 1.0
    T = jnp.einsum("kpw,hkio->hpiwo", jnp.asarray(sel), w_hwio)    # (3,W+2,Cin,W,Cout)
    T = T.reshape(K, WC)
    T = jnp.pad(T, ((0, Kpad - K), (0, 0)))                        # (Kpad, WC)

    b_conv = jnp.tile(b3.astype(jnp.float32), W)[None, :]          # (1, WC)

    # Bilinear column-mean weights folded with the 1x1-conv weight:
    # M[w*Cout + c, k] = ww[w] * w1[k, c].
    Wout = int(math.floor(W * scale_factor))
    ww = jnp.asarray(_align_corners_avg_weights(W, Wout))          # (W,)
    M = (ww[:, None, None]
         * jnp.transpose(w1).astype(jnp.float32)[None, :, :]).reshape(WC, Cout)

    return dict(
        T=T, b_conv=b_conv, M=M,
        gamma=gamma.astype(jnp.float32)[None, :],
        beta=beta.astype(jnp.float32)[None, :],
        b1=b1.astype(jnp.float32)[None, :],
    )


# ----------------------------------------------------------------------------
# Forward wrapper.
# ----------------------------------------------------------------------------
def dprior_forward(x_nchw, params, *, scale_factor, eps=1e-5):
    """Pallas implementation of dprior_module.forward (training-mode BN).
    x_nchw: (N, Cin, H, W) f32.  Returns (N, Cout, 1, 1)."""
    N, Cin, H, W = x_nchw.shape
    T = params["T"]
    Kpad, WC = int(T.shape[0]), int(T.shape[1])
    Cout = int(params["b1"].shape[-1])
    assert WC == W * Cout, (WC, W, Cout)
    K = 3 * (W + 2) * Cin
    NH = N * H

    # --- per-call glue: NCHW -> padded NHWC, lane-concat the 3 row shifts ---
    x_nhwc = jnp.transpose(x_nchw, (0, 2, 3, 1))                   # (N, H, W, Cin)
    x_pad = jnp.pad(x_nhwc, ((0, 0), (1, 1), (1, 1), (0, 0)))      # (N, H+2, W+2, Cin)
    x_flat = x_pad.reshape(N, H + 2, (W + 2) * Cin)
    x_cat = jnp.concatenate(
        [x_flat[:, 0:H], x_flat[:, 1:H + 1], x_flat[:, 2:H + 2]], axis=-1)
    if Kpad > K:
        x_cat = jnp.pad(x_cat, ((0, 0), (0, 0), (0, Kpad - K)))
    x_cat = x_cat.reshape(NH, Kpad)                                # (N*H, Kpad)

    # --- structural (shape-only) constants, built in numpy at trace time ---
    Hout = int(math.floor(H * scale_factor))
    wh = _align_corners_avg_weights(H, Hout)                       # (H,)
    wh_rows = jnp.asarray(np.tile(wh, N)[:, None])                 # (N*H, 1)
    pmat_np = np.zeros((WC, Cout), dtype=np.float32)               # lane -> channel
    for w in range(W):
        for c in range(Cout):
            pmat_np[w * Cout + c, c] = 1.0
    pmat = jnp.asarray(pmat_np)
    qmat = jnp.asarray(pmat_np.T)                                  # channel -> lane

    kernel = functools.partial(
        dprior_fused_kernel, n=N, h=H, cout=Cout,
        inv_count=1.0 / float(N * H * W), eps=float(eps))

    # TODO(synk): for large H*W*Cout, tile H/N with halo'd BlockSpecs, keep the
    # BN-stat reduction on an "arbitrary" grid axis, and set an explicit
    # vmem_limit_bytes (budget against v7x's 64 MiB physical VMEM).
    out = pl.pallas_call(
        kernel,
        out_shape=jax.ShapeDtypeStruct((N, Cout), jnp.float32),
        grid=(1,),
        in_specs=[
            pl.BlockSpec((NH, Kpad), lambda i: (0, 0)),
            pl.BlockSpec((Kpad, WC), lambda i: (0, 0)),
            pl.BlockSpec((1, WC), lambda i: (0, 0)),
            pl.BlockSpec((1, Cout), lambda i: (0, 0)),
            pl.BlockSpec((1, Cout), lambda i: (0, 0)),
            pl.BlockSpec((WC, Cout), lambda i: (0, 0)),
            pl.BlockSpec((Cout, WC), lambda i: (0, 0)),
            pl.BlockSpec((NH, 1), lambda i: (0, 0)),
            pl.BlockSpec((WC, Cout), lambda i: (0, 0)),
            pl.BlockSpec((1, Cout), lambda i: (0, 0)),
        ],
        out_specs=pl.BlockSpec((N, Cout), lambda i: (0, 0)),
        # Cross-batch BN reduction lives inside the single grid step, so the
        # axis must be "arbitrary" (never shard BN stats across v7x's 2 TCs).
        compiler_params=pltpu.CompilerParams(
            dimension_semantics=("arbitrary",)),
    )(x_cat, T, params["b_conv"], params["gamma"], params["beta"],
      pmat, qmat, wh_rows, params["M"], params["b1"])

    return out.reshape(N, Cout, 1, 1)


# ----------------------------------------------------------------------------
# Pure-JAX reference that materializes the bilinear upsample (for validation).
# ----------------------------------------------------------------------------
def _reference_forward(x, w3, b3, gamma, beta, w1, b1, scale_factor, eps=1e-5):
    y = jax.lax.conv_general_dilated(
        x, w3, window_strides=(1, 1), padding=((1, 1), (1, 1)),
        dimension_numbers=("NCHW", "OIHW", "NCHW")) + b3[None, :, None, None]
    mean = jnp.mean(y, axis=(0, 2, 3), keepdims=True)
    var = jnp.mean((y - mean) ** 2, axis=(0, 2, 3), keepdims=True)   # biased
    y = (y - mean) / jnp.sqrt(var + eps) * gamma[None, :, None, None] \
        + beta[None, :, None, None]
    y = jnp.maximum(y, 0.0)
    n, c, h, w = y.shape
    hout = int(math.floor(h * scale_factor))
    wout = int(math.floor(w * scale_factor))
    a = _interp_matrix(h, hout)
    b = _interp_matrix(w, wout)
    up = jnp.einsum("ih,nchw,jw->ncij", a, y, b)                  # materialized
    z = jnp.einsum("kc,ncij->nkij", w1, up) + b1[None, :, None, None]
    return jnp.mean(z, axis=(2, 3), keepdims=True)                # (N, Cout, 1, 1)


if __name__ == "__main__":
    # Small shapes consistent with the module: N=2, in=4, out=8, 16x16, scale=2.
    N, CH_IN, CH_OUT, H, W, SCALE = 2, 4, 8, 16, 16, 2

    key = jax.random.PRNGKey(0)
    kx, kw3, kb3, kg, kbt, kw1, kb1 = jax.random.split(key, 7)

    x = jax.random.normal(kx, (N, CH_IN, H, W), dtype=jnp.float32)

    fan3 = CH_IN * 9
    bnd3 = 1.0 / math.sqrt(fan3)
    w3 = jax.random.uniform(kw3, (CH_OUT, CH_IN, 3, 3),
                            minval=-bnd3, maxval=bnd3, dtype=jnp.float32)
    b3 = jax.random.uniform(kb3, (CH_OUT,),
                            minval=-bnd3, maxval=bnd3, dtype=jnp.float32)
    gamma = jax.random.uniform(kg, (CH_OUT,), minval=0.5, maxval=1.5,
                               dtype=jnp.float32)
    beta = jax.random.uniform(kbt, (CH_OUT,), minval=-0.5, maxval=0.5,
                              dtype=jnp.float32)
    bnd1 = 1.0 / math.sqrt(CH_OUT)
    w1 = jax.random.uniform(kw1, (CH_OUT, CH_OUT),
                            minval=-bnd1, maxval=bnd1, dtype=jnp.float32)
    b1 = jax.random.uniform(kb1, (CH_OUT,),
                            minval=-bnd1, maxval=bnd1, dtype=jnp.float32)

    # Weight-derived constants: built once, reused for every forward call.
    params = prepare_params(w3, b3, gamma, beta, w1, b1,
                            W=W, scale_factor=SCALE)

    fwd = jax.jit(functools.partial(dprior_forward, scale_factor=SCALE))
    out = jax.block_until_ready(fwd(x, params))
    ref = jax.block_until_ready(
        _reference_forward(x, w3, b3, gamma, beta, w1, b1, SCALE))

    assert out.shape == (N, CH_OUT, 1, 1), out.shape
    max_err = float(jnp.max(jnp.abs(out - ref)))
    assert max_err < 1e-4, max_err

    print("KERNEL_OK")
</pallas_src>

<mosaic_0001>
module attributes {stable_mosaic.version = 11 : i64} {
  func.func @dprior_fused_kernel(%arg0: i32, %arg1: memref<32x256xf32, #tpu.memory_space<vmem>>, %arg2: memref<256x128xf32, #tpu.memory_space<vmem>>, %arg3: memref<1x128xf32, #tpu.memory_space<vmem>>, %arg4: memref<1x8xf32, #tpu.memory_space<vmem>>, %arg5: memref<1x8xf32, #tpu.memory_space<vmem>>, %arg6: memref<128x8xf32, #tpu.memory_space<vmem>>, %arg7: memref<8x128xf32, #tpu.memory_space<vmem>>, %arg8: memref<32x1xf32, #tpu.memory_space<vmem>>, %arg9: memref<128x8xf32, #tpu.memory_space<vmem>>, %arg10: memref<1x8xf32, #tpu.memory_space<vmem>>, %arg11: memref<2x8xf32, #tpu.memory_space<vmem>>) attributes {dimension_semantics = [#tpu.dimension_semantics<arbitrary>], iteration_bounds = array<i64: 1>, scalar_prefetch = 0 : i64, scratch_operands = 0 : i64, tpu.core_type = #tpu.core_type<tc>, window_params = [{pipeline_mode = #tpu.pipeline_mode<synchronous>, transform_indices = @transform_0, window_bounds = array<i64: 32, 256>}, {pipeline_mode = #tpu.pipeline_mode<synchronous>, transform_indices = @transform_1, window_bounds = array<i64: 256, 128>}, {pipeline_mode = #tpu.pipeline_mode<synchronous>, transform_indices = @transform_2, window_bounds = array<i64: 1, 128>}, {pipeline_mode = #tpu.pipeline_mode<synchronous>, transform_indices = @transform_3, window_bounds = array<i64: 1, 8>}, {pipeline_mode = #tpu.pipeline_mode<synchronous>, transform_indices = @transform_4, window_bounds = array<i64: 1, 8>}, {pipeline_mode = #tpu.pipeline_mode<synchronous>, transform_indices = @transform_5, window_bounds = array<i64: 128, 8>}, {pipeline_mode = #tpu.pipeline_mode<synchronous>, transform_indices = @transform_6, window_bounds = array<i64: 8, 128>}, {pipeline_mode = #tpu.pipeline_mode<synchronous>, transform_indices = @transform_7, window_bounds = array<i64: 32, 1>}, {pipeline_mode = #tpu.pipeline_mode<synchronous>, transform_indices = @transform_8, window_bounds = array<i64: 128, 8>}, {pipeline_mode = #tpu.pipeline_mode<synchronous>, transform_indices = @transform_9, window_bounds = array<i64: 1, 8>}, {pipeline_mode = #tpu.pipeline_mode<synchronous>, transform_indices = @transform_10, window_bounds = array<i64: 2, 8>}]} {
    %c0 = arith.constant 0 : index
    %c0_0 = arith.constant 0 : index
    %0 = vector.load %arg1[%c0, %c0_0] : memref<32x256xf32, #tpu.memory_space<vmem>>, vector<32x256xf32>
    %c0_1 = arith.constant 0 : index
    %c0_2 = arith.constant 0 : index
    %1 = vector.load %arg2[%c0_1, %c0_2] : memref<256x128xf32, #tpu.memory_space<vmem>>, vector<256x128xf32>
    %cst = arith.constant dense<0.000000e+00> : vector<32x128xf32>
    %2 = tpu.matmul %0, %1, %cst {dimension_numbers = #tpu.dot_dimension_numbers<[1], [0], [0], [1], [0, 0, 1, 1], [], []>} : vector<32x256xf32>, vector<256x128xf32>, vector<32x128xf32> -> vector<32x128xf32>
    %c0_3 = arith.constant 0 : index
    %c0_4 = arith.constant 0 : index
    %3 = vector.load %arg3[%c0_3, %c0_4] : memref<1x128xf32, #tpu.memory_space<vmem>>, vector<1x128xf32>
    %4 = vector.broadcast %3 : vector<1x128xf32> to vector<32x128xf32>
    %5 = arith.addf %2, %4 : vector<32x128xf32>
    %cst_5 = arith.constant dense<0.000000e+00> : vector<128xf32>
    %6 = vector.multi_reduction <add>, %5, %cst_5 [0] : vector<32x128xf32> to vector<128xf32>
    %7 = vector.shape_cast %6 : vector<128xf32> to vector<1x128xf32>
    %c0_6 = arith.constant 0 : index
    %c0_7 = arith.constant 0 : index
    %8 = vector.load %arg6[%c0_6, %c0_7] : memref<128x8xf32, #tpu.memory_space<vmem>>, vector<128x8xf32>
    %cst_8 = arith.constant dense<0.000000e+00> : vector<1x8xf32>
    %9 = tpu.matmul %7, %8, %cst_8 {dimension_numbers = #tpu.dot_dimension_numbers<[1], [0], [0], [1], [0, 0, 1, 1], [], []>} : vector<1x128xf32>, vector<128x8xf32>, vector<1x8xf32> -> vector<1x8xf32>
    %cst_9 = arith.constant 0.001953125 : f32
    %10 = vector.broadcast %cst_9 : f32 to vector<1x8xf32>
    %11 = arith.mulf %9, %10 : vector<1x8xf32>
    %c0_10 = arith.constant 0 : index
    %c0_11 = arith.constant 0 : index
    %12 = vector.load %arg7[%c0_10, %c0_11] : memref<8x128xf32, #tpu.memory_space<vmem>>, vector<8x128xf32>
    %cst_12 = arith.constant dense<0.000000e+00> : vector<1x128xf32>
    %13 = tpu.matmul %11, %12, %cst_12 {dimension_numbers = #tpu.dot_dimension_numbers<[1], [0], [0], [1], [0, 0, 1, 1], [], []>} : vector<1x8xf32>, vector<8x128xf32>, vector<1x128xf32> -> vector<1x128xf32>
    %14 = vector.broadcast %13 : vector<1x128xf32> to vector<32x128xf32>
    %15 = arith.subf %5, %14 : vector<32x128xf32>
    %16 = arith.mulf %15, %15 : vector<32x128xf32>
    %cst_13 = arith.constant dense<0.000000e+00> : vector<128xf32>
    %17 = vector.multi_reduction <add>, %16, %cst_13 [0] : vector<32x128xf32> to vector<128xf32>
    %18 = vector.shape_cast %17 : vector<128xf32> to vector<1x128xf32>
    %c0_14 = arith.constant 0 : index
    %c0_15 = arith.constant 0 : index
    %19 = vector.load %arg6[%c0_14, %c0_15] : memref<128x8xf32, #tpu.memory_space<vmem>>, vector<128x8xf32>
    %cst_16 = arith.constant dense<0.000000e+00> : vector<1x8xf32>
    %20 = tpu.matmul %18, %19, %cst_16 {dimension_numbers = #tpu.dot_dimension_numbers<[1], [0], [0], [1], [0, 0, 1, 1], [], []>} : vector<1x128xf32>, vector<128x8xf32>, vector<1x8xf32> -> vector<1x8xf32>
    %cst_17 = arith.constant 0.001953125 : f32
    %21 = vector.broadcast %cst_17 : f32 to vector<1x8xf32>
    %22 = arith.mulf %20, %21 : vector<1x8xf32>
    %c0_18 = arith.constant 0 : index
    %c0_19 = arith.constant 0 : index
    %23 = vector.load %arg4[%c0_18, %c0_19] : memref<1x8xf32, #tpu.memory_space<vmem>>, vector<1x8xf32>
    %cst_20 = arith.constant 9.99999974E-6 : f32
    %24 = vector.broadcast %cst_20 : f32 to vector<1x8xf32>
    %25 = arith.addf %22, %24 : vector<1x8xf32>
    %26 = math.rsqrt %25 : vector<1x8xf32>
    %27 = arith.mulf %23, %26 : vector<1x8xf32>
    %c0_21 = arith.constant 0 : index
    %c0_22 = arith.constant 0 : index
    %28 = vector.load %arg7[%c0_21, %c0_22] : memref<8x128xf32, #tpu.memory_space<vmem>>, vector<8x128xf32>
    %cst_23 = arith.constant dense<0.000000e+00> : vector<1x128xf32>
    %29 = tpu.matmul %27, %28, %cst_23 {dimension_numbers = #tpu.dot_dimension_numbers<[1], [0], [0], [1], [0, 0, 1, 1], [], []>} : vector<1x8xf32>, vector<8x128xf32>, vector<1x128xf32> -> vector<1x128xf32>
    %c0_24 = arith.constant 0 : index
    %c0_25 = arith.constant 0 : index
    %30 = vector.load %arg5[%c0_24, %c0_25] : memref<1x8xf32, #tpu.memory_space<vmem>>, vector<1x8xf32>
    %c0_26 = arith.constant 0 : index
    %c0_27 = arith.constant 0 : index
    %31 = vector.load %arg7[%c0_26, %c0_27] : memref<8x128xf32, #tpu.memory_space<vmem>>, vector<8x128xf32>
    %cst_28 = arith.constant dense<0.000000e+00> : vector<1x128xf32>
    %32 = tpu.matmul %30, %31, %cst_28 {dimension_numbers = #tpu.dot_dimension_numbers<[1], [0], [0], [1], [0, 0, 1, 1], [], []>} : vector<1x8xf32>, vector<8x128xf32>, vector<1x128xf32> -> vector<1x128xf32>
    %33 = vector.broadcast %29 : vector<1x128xf32> to vector<32x128xf32>
    %34 = arith.mulf %15, %33 : vector<32x128xf32>
    %35 = vector.broadcast %32 : vector<1x128xf32> to vector<32x128xf32>
    %36 = arith.addf %34, %35 : vector<32x128xf32>
    %cst_29 = arith.constant 0.000000e+00 : f32
    %37 = vector.broadcast %cst_29 : f32 to vector<32x128xf32>
    %38 = arith.maximumf %36, %37 : vector<32x128xf32>
    %c0_30 = arith.constant 0 : index
    %c0_31 = arith.constant 0 : index
    %39 = vector.load %arg8[%c0_30, %c0_31] : memref<32x1xf32, #tpu.memory_space<vmem>>, vector<32x1xf32>
    %40 = vector.broadcast %39 : vector<32x1xf32> to vector<32x128xf32>
    %41 = arith.mulf %38, %40 : vector<32x128xf32>
    %c0_32 = arith.constant 0 : index
    %c0_33 = arith.constant 0 : index
    %42 = vector.load %arg9[%c0_32, %c0_33] : memref<128x8xf32, #tpu.memory_space<vmem>>, vector<128x8xf32>
    %cst_34 = arith.constant dense<0.000000e+00> : vector<32x8xf32>
    %43 = tpu.matmul %41, %42, %cst_34 {dimension_numbers = #tpu.dot_dimension_numbers<[1], [0], [0], [1], [0, 0, 1, 1], [], []>} : vector<32x128xf32>, vector<128x8xf32>, vector<32x8xf32> -> vector<32x8xf32>
    %44 = vector.shape_cast %43 : vector<32x8xf32> to vector<2x16x8xf32>
    %cst_35 = arith.constant dense<0.000000e+00> : vector<2x8xf32>
    %45 = vector.multi_reduction <add>, %44, %cst_35 [1] : vector<2x16x8xf32> to vector<2x8xf32>
    %c0_36 = arith.constant 0 : index
    %c0_37 = arith.constant 0 : index
    %46 = vector.load %arg10[%c0_36, %c0_37] : memref<1x8xf32, #tpu.memory_space<vmem>>, vector<1x8xf32>
    %47 = vector.broadcast %46 : vector<1x8xf32> to vector<2x8xf32>
    %48 = arith.addf %45, %47 : vector<2x8xf32>
    %c0_38 = arith.constant 0 : index
    %c0_39 = arith.constant 0 : index
    %49 = vector.load %arg11[%c0_38, %c0_39] : memref<2x8xf32, #tpu.memory_space<vmem>>, vector<2x8xf32>
    tpu.vector_store %arg11[%c0_38, %c0_39], %48 {strides = array<i32>} : memref<2x8xf32, #tpu.memory_space<vmem>>, vector<2x8xf32>,
    return
  }
  func.func @transform_0(%arg0: i32) -> (i32, i32) {
    %c0_i32 = arith.constant 0 : i32
    %c0_i32_0 = arith.constant 0 : i32
    %c0_i32_1 = arith.constant 0 : i32
    return %c0_i32, %c0_i32_0 : i32, i32
  }
  func.func @transform_1(%arg0: i32) -> (i32, i32) {
    %c0_i32 = arith.constant 0 : i32
    %c0_i32_0 = arith.constant 0 : i32
    %c0_i32_1 = arith.constant 0 : i32
    return %c0_i32, %c0_i32_0 : i32, i32
  }
  func.func @transform_2(%arg0: i32) -> (i32, i32) {
    %c0_i32 = arith.constant 0 : i32
    %c0_i32_0 = arith.constant 0 : i32
    %c0_i32_1 = arith.constant 0 : i32
    return %c0_i32, %c0_i32_0 : i32, i32
  }
  func.func @transform_3(%arg0: i32) -> (i32, i32) {
    %c0_i32 = arith.constant 0 : i32
    %c0_i32_0 = arith.constant 0 : i32
    %c0_i32_1 = arith.constant 0 : i32
    return %c0_i32, %c0_i32_0 : i32, i32
  }
  func.func @transform_4(%arg0: i32) -> (i32, i32) {
    %c0_i32 = arith.constant 0 : i32
    %c0_i32_0 = arith.constant 0 : i32
    %c0_i32_1 = arith.constant 0 : i32
    return %c0_i32, %c0_i32_0 : i32, i32
  }
  func.func @transform_5(%arg0: i32) -> (i32, i32) {
    %c0_i32 = arith.constant 0 : i32
    %c0_i32_0 = arith.constant 0 : i32
    %c0_i32_1 = arith.constant 0 : i32
    return %c0_i32, %c0_i32_0 : i32, i32
  }
  func.func @transform_6(%arg0: i32) -> (i32, i32) {
    %c0_i32 = arith.constant 0 : i32
    %c0_i32_0 = arith.constant 0 : i32
    %c0_i32_1 = arith.constant 0 : i32
    return %c0_i32, %c0_i32_0 : i32, i32
  }
  func.func @transform_7(%arg0: i32) -> (i32, i32) {
    %c0_i32 = arith.constant 0 : i32
    %c0_i32_0 = arith.constant 0 : i32
    %c0_i32_1 = arith.constant 0 : i32
    return %c0_i32, %c0_i32_0 : i32, i32
  }
  func.func @transform_8(%arg0: i32) -> (i32, i32) {
    %c0_i32 = arith.constant 0 : i32
    %c0_i32_0 = arith.constant 0 : i32
    %c0_i32_1 = arith.constant 0 : i32
    return %c0_i32, %c0_i32_0 : i32, i32
  }
  func.func @transform_9(%arg0: i32) -> (i32, i32) {
    %c0_i32 = arith.constant 0 : i32
    %c0_i32_0 = arith.constant 0 : i32
    %c0_i32_1 = arith.constant 0 : i32
    return %c0_i32, %c0_i32_0 : i32, i32
  }
  func.func @transform_10(%arg0: i32) -> (i32, i32) {
    %c0_i32 = arith.constant 0 : i32
    %c0_i32_0 = arith.constant 0 : i32
    %c0_i32_1 = arith.constant 0 : i32
    return %c0_i32, %c0_i32_0 : i32, i32
  }
}

</mosaic_0001>

<llo_original>
// kernel: dprior_forward.1
$region0: #{dprior_forward.1}
  #allocation0 [shape = 'u32[]', space=smem, size = 0x4, offset = 0x4, fixed_abs, tag = 'smem constant byte address 0x4 - core index']
  #allocation1 [shape = 'u32[72,128]{1,0:T(1,128)}', space=vmem, size = 0x9000, scoped, tag = 'internal scratch']
  %s0 = inlined_call_operand.vmem [shape: f32[32,256], index: 0, kind: input, shape index: {}]
  %s1 = inlined_call_operand.vmem [shape: f32[256,128], index: 1, kind: input, shape index: {}]
  %s2 = inlined_call_operand.vmem [shape: f32[1,128], index: 2, kind: input, shape index: {}]
  %s3 = inlined_call_operand.vmem [shape: f32[1,8], index: 3, kind: input, shape index: {}]
  %s4 = inlined_call_operand.vmem [shape: f32[1,8], index: 4, kind: input, shape index: {}]
  %s5 = inlined_call_operand.vmem [shape: f32[128,8], index: 5, kind: input, shape index: {}]
  %s6 = inlined_call_operand.vmem [shape: f32[8,128], index: 6, kind: input, shape index: {}]
  %s7 = inlined_call_operand.vmem [shape: f32[32,1], index: 7, kind: input, shape index: {}]
  %s8 = inlined_call_operand.vmem [shape: f32[128,8], index: 8, kind: input, shape index: {}]
  %s9 = inlined_call_operand.vmem [shape: f32[1,8], index: 9, kind: input, shape index: {}]
  %s10 = inlined_call_operand.hbm [shape: f32[2,8], index: 10, kind: output, shape index: {}]
  %s11 = sld [smem:[#allocation0]]
  $region50: #{dprior_forward.1} parent=0
    _
  %s13 = ssub.s32 1, %s11
  %s14 = scalar_select 0, %s13, %s11
  $region1: #{dprior_forward.1} parent=0
    #allocation2 [shape = 'u8[1024]{0}', space=vmem, size = 0x400, scoped, tag = 'output window, operand 0, single buffered']
    #allocation3 [shape = 's32[1]{0}', space=sflag, size = 0x4, scoped, tag = 'scoped memory for dprior_forward.1']
    %15 = vsyncpa [#allocation3], 0
    // Predicated region
    $region2: #{dprior_forward.1} parent=1 // pred_check
      _
    $region3: #{dprior_forward.1} parent=1 // pred_check_branch
      %17 = sbr.rel (0) target = $region5
    $region4: #{dprior_forward.1} parent=1 // pred_region
      _
    $region5: #{dprior_forward.1} parent=1 // pred_fallthru
      _
    // Predicated region
    $region6: #{dprior_forward.1} parent=1 // pred_check
      _
    $region7: #{dprior_forward.1} parent=1 // pred_check_branch
      %19 = sbr.rel (0) target = $region9
    $region8: #{dprior_forward.1} parent=1 // pred_region
      _
    $region9: #{dprior_forward.1} parent=1 // pred_fallthru
      _
    // Predicated region
    $region10: #{dprior_forward.1} parent=1 // pred_check
      _
    $region11: #{dprior_forward.1} parent=1 // pred_check_branch
      %21 = sbr.rel (0) target = $region13
    $region12: #{dprior_forward.1} parent=1 // pred_region
      _
    $region13: #{dprior_forward.1} parent=1 // pred_fallthru
      _
    // Predicated region
    $region14: #{dprior_forward.1} parent=1 // pred_check
      _
    $region15: #{dprior_forward.1} parent=1 // pred_check_branch
      %23 = sbr.rel (0) target = $region17
    $region16: #{dprior_forward.1} parent=1 // pred_region
      _
    $region17: #{dprior_forward.1} parent=1 // pred_fallthru
      _
    // Predicated region
    $region18: #{dprior_forward.1} parent=1 // pred_check
      _
    $region19: #{dprior_forward.1} parent=1 // pred_check_branch
      %25 = sbr.rel (0) target = $region21
    $region20: #{dprior_forward.1} parent=1 // pred_region
      _
    $region21: #{dprior_forward.1} parent=1 // pred_fallthru
      _
    // Predicated region
    $region22: #{dprior_forward.1} parent=1 // pred_check
      _
    $region23: #{dprior_forward.1} parent=1 // pred_check_branch
      %27 = sbr.rel (0) target = $region25
    $region24: #{dprior_forward.1} parent=1 // pred_region
      _
    $region25: #{dprior_forward.1} parent=1 // pred_fallthru
      _
    // Predicated region
    $region26: #{dprior_forward.1} parent=1 // pred_check
      _
    $region27: #{dprior_forward.1} parent=1 // pred_check_branch
      %29 = sbr.rel (0) target = $region29
    $region28: #{dprior_forward.1} parent=1 // pred_region
      _
    $region29: #{dprior_forward.1} parent=1 // pred_fallthru
      _
    // Predicated region
    $region30: #{dprior_forward.1} parent=1 // pred_check
      _
    $region31: #{dprior_forward.1} parent=1 // pred_check_branch
      %31 = sbr.rel (0) target = $region33
    $region32: #{dprior_forward.1} parent=1 // pred_region
      _
    $region33: #{dprior_forward.1} parent=1 // pred_fallthru
      _
    // Predicated region
    $region34: #{dprior_forward.1} parent=1 // pred_check
      _
    $region35: #{dprior_forward.1} parent=1 // pred_check_branch
      %33 = sbr.rel (0) target = $region37
    $region36: #{dprior_forward.1} parent=1 // pred_region
      _
    $region37: #{dprior_forward.1} parent=1 // pred_fallthru
      _
    // Predicated region
    $region38: #{dprior_forward.1} parent=1 // pred_check
      _
    $region39: #{dprior_forward.1} parent=1 // pred_check_branch
      %35 = sbr.rel (0) target = $region41
    $region40: #{dprior_forward.1} parent=1 // pred_region
      _
    $region41: #{dprior_forward.1} parent=1 // pred_fallthru
      _
    %v36 = vld [vmem:[%s0] sm:$0xff]
    %v37 = vld [vmem:[%s0 + $0x8] sm:$0xff]
    %v38 = vld [vmem:[%s0 + $0x10] sm:$0xff]
    %v39 = vld [vmem:[%s0 + $0x18] sm:$0xff]
    %v40 = vld [vmem:[%s0 + $0x20] sm:$0xff]
    %v41 = vld [vmem:[%s0 + $0x28] sm:$0xff]
    %v42 = vld [vmem:[%s0 + $0x30] sm:$0xff]
    %v43 = vld [vmem:[%s0 + $0x38] sm:$0xff]
    %v44 = vld [vmem:[%s1] sm:$0xff]
    %v45 = vld [vmem:[%s1 + $0x8] sm:$0xff]
    %v46 = vld [vmem:[%s1 + $0x10] sm:$0xff]
    %v47 = vld [vmem:[%s1 + $0x18] sm:$0xff]
    %v48 = vld [vmem:[%s1 + $0x20] sm:$0xff]
    %v49 = vld [vmem:[%s1 + $0x28] sm:$0xff]
    %v50 = vld [vmem:[%s1 + $0x30] sm:$0xff]
    %v51 = vld [vmem:[%s1 + $0x38] sm:$0xff]
    %v52 = vld [vmem:[%s1 + $0x40] sm:$0xff]
    %v53 = vld [vmem:[%s1 + $0x48] sm:$0xff]
    %v54 = vld [vmem:[%s1 + $0x50] sm:$0xff]
    %v55 = vld [vmem:[%s1 + $0x58] sm:$0xff]
    %v56 = vld [vmem:[%s1 + $0x60] sm:$0xff]
    %v57 = vld [vmem:[%s1 + $0x68] sm:$0xff]
    %v58 = vld [vmem:[%s1 + $0x70] sm:$0xff]
    %v59 = vld [vmem:[%s1 + $0x78] sm:$0xff]
    %v60 = vld [vmem:[%s1 + $0x80] sm:$0xff]
    %v61 = vld [vmem:[%s1 + $0x88] sm:$0xff]
    %v62 = vld [vmem:[%s1 + $0x90] sm:$0xff]
    %v63 = vld [vmem:[%s1 + $0x98] sm:$0xff]
    %v64 = vld [vmem:[%s1 + $0xa0] sm:$0xff]
    %v65 = vld [vmem:[%s1 + $0xa8] sm:$0xff]
    %v66 = vld [vmem:[%s1 + $0xb0] sm:$0xff]
    %v67 = vld [vmem:[%s1 + $0xb8] sm:$0xff]
    %v68 = vld [vmem:[%s1 + $0xc0] sm:$0xff]
    %v69 = vld [vmem:[%s1 + $0xc8] sm:$0xff]
    %v70 = vld [vmem:[%s1 + $0xd0] sm:$0xff]
    %v71 = vld [vmem:[%s1 + $0xd8] sm:$0xff]
    %v72 = vld [vmem:[%s1 + $0xe0] sm:$0xff]
    %v73 = vld [vmem:[%s1 + $0xe8] sm:$0xff]
    %v74 = vld [vmem:[%s1 + $0xf0] sm:$0xff]
    %v75 = vld [vmem:[%s1 + $0xf8] sm:$0xff]
    %v76 = vld [vmem:[%s2] sm:$0x1]
    %v78 = vperm.slane %v76, 0
    %80 = vmatpush.msra.mxu0 %v59
    %81 = vmatpush.msra.mxu0 %v58
    %82 = vmatpush.msra.mxu0 %v57
    %83 = vmatpush.msra.mxu0 %v56
    %84 = vmatpush.msra.mxu0 %v55
    %85 = vmatpush.msra.mxu0 %v54
    %86 = vmatpush.msra.mxu0 %v53
    %87 = vmatpush.msra.mxu0 %v52
    %88 = vmatpush.msra.mxu0 %v51
    %89 = vmatpush.msra.mxu0 %v50
    %90 = vmatpush.msra.mxu0 %v49
    %91 = vmatpush.msra.mxu0 %v48
    %92 = vmatpush.msra.mxu0 %v47
    %93 = vmatpush.msra.mxu0 %v46
    %94 = vmatpush.msra.mxu0 %v45
    %95 = vmatpush.msra.mxu0 %v44
    %96 = vmatmul.f32.gmra.mxu0 %v36
    %v97 = vpop.f32.mrf.mxu0
    %v98 = vadd.f32 %v78, %v97
    %99 = vmatmul.f32.gmra.mxu0 %v38
    %v100 = vpop.f32.mrf.mxu0
    %v101 = vadd.f32 %v78, %v100
    %102 = vmatmul.f32.gmra.mxu0 %v40
    %v103 = vpop.f32.mrf.mxu0
    %v104 = vadd.f32 %v78, %v103
    %105 = vmatmul.f32.gmra.mxu0 %v42
    %v106 = vpop.f32.mrf.mxu0
    %v107 = vadd.f32 %v78, %v106
    %108 = vdwg.mxu0
    %109 = vmatpush.msra.mxu0 %v75
    %110 = vmatpush.msra.mxu0 %v74
    %111 = vmatpush.msra.mxu0 %v73
    %112 = vmatpush.msra.mxu0 %v72
    %113 = vmatpush.msra.mxu0 %v71
    %114 = vmatpush.msra.mxu0 %v70
    %115 = vmatpush.msra.mxu0 %v69
    %116 = vmatpush.msra.mxu0 %v68
    %117 = vmatpush.msra.mxu0 %v67
    %118 = vmatpush.msra.mxu0 %v66
    %119 = vmatpush.msra.mxu0 %v65
    %120 = vmatpush.msra.mxu0 %v64
    %121 = vmatpush.msra.mxu0 %v63
    %122 = vmatpush.msra.mxu0 %v62
    %123 = vmatpush.msra.mxu0 %v61
    %124 = vmatpush.msra.mxu0 %v60
    %125 = vmatmul.f32.gmra.mxu0 %v37
    %v126 = vpop.f32.mrf.mxu0
    %v127 = vadd.f32 %v98, %v126
    %128 = vmatmul.f32.gmra.mxu0 %v39
    %v129 = vpop.f32.mrf.mxu0
    %v130 = vadd.f32 %v101, %v129
    %131 = vmatmul.f32.gmra.mxu0 %v41
    %v132 = vpop.f32.mrf.mxu0
    %v133 = vadd.f32 %v104, %v132
    %134 = vmatmul.f32.gmra.mxu0 %v43
    %v135 = vpop.f32.mrf.mxu0
    %v136 = vadd.f32 %v107, %v135
    %137 = vdwg.mxu0
    %v138 = vadd.f32 %v127, %v130
    %v139 = vadd.f32 %v138, %v133
    %v140 = vadd.f32 %v139, %v136
    %v141 = vrot.slane %v140, 4
    %v142 = vadd.f32 %v140, %v141
    %v143 = vrot.slane %v142, 2
    %v144 = vadd.f32 %v142, %v143
    %v145 = vrot.slane %v144, 1
    %v146 = vadd.f32 %v144, %v145
    %v147 = vld [vmem:[%s5] sm:$0xff]
    %v148 = vld [vmem:[%s5 + $0x8] sm:$0xff]
    %v149 = vld [vmem:[%s5 + $0x10] sm:$0xff]
    %v150 = vld [vmem:[%s5 + $0x18] sm:$0xff]
    %v151 = vld [vmem:[%s5 + $0x20] sm:$0xff]
    %v152 = vld [vmem:[%s5 + $0x28] sm:$0xff]
    %v153 = vld [vmem:[%s5 + $0x30] sm:$0xff]
    %v154 = vld [vmem:[%s5 + $0x38] sm:$0xff]
    %v155 = vld [vmem:[%s5 + $0x40] sm:$0xff]
    %v156 = vld [vmem:[%s5 + $0x48] sm:$0xff]
    %v157 = vld [vmem:[%s5 + $0x50] sm:$0xff]
    %v158 = vld [vmem:[%s5 + $0x58] sm:$0xff]
    %v159 = vld [vmem:[%s5 + $0x60] sm:$0xff]
    %v160 = vld [vmem:[%s5 + $0x68] sm:$0xff]
    %v161 = vld [vmem:[%s5 + $0x70] sm:$0xff]
    %v162 = vld [vmem:[%s5 + $0x78] sm:$0xff]
    %163 = vmatpush.msra.mxu0 %v162
    %164 = vmatpush.msra.mxu0 %v161
    %165 = vmatpush.msra.mxu0 %v160
    %166 = vmatpush.msra.mxu0 %v159
    %167 = vmatpush.msra.mxu0 %v158
    %168 = vmatpush.msra.mxu0 %v157
    %169 = vmatpush.msra.mxu0 %v156
    %170 = vmatpush.msra.mxu0 %v155
    %171 = vmatpush.msra.mxu0 %v154
    %172 = vmatpush.msra.mxu0 %v153
    %173 = vmatpush.msra.mxu0 %v152
    %174 = vmatpush.msra.mxu0 %v151
    %175 = vmatpush.msra.mxu0 %v150
    %176 = vmatpush.msra.mxu0 %v149
    %177 = vmatpush.msra.mxu0 %v148
    %178 = vmatpush.msra.mxu0 %v147
    %179 = vmatmul.f32.gmra.mxu0 %v146
    %v180 = vpop.f32.mrf.mxu0
    %v181 = vadd.f32 0.0, %v180
    %182 = vdwg.mxu0
    %v183 = vmul.f32 %v181, 0.001953125
    %v184 = vld [vmem:[%s6] sm:$0xff]
    %vm185 = vcmask 64512
    %v187 = vsel %vm185, %v183, 0
    %189 = vmatpush.msra.mxu0 0.0
    %190 = vmatpush.msra.mxu0 0.0
    %191 = vmatpush.msra.mxu0 0.0
    %192 = vmatpush.msra.mxu0 0.0
    %193 = vmatpush.msra.mxu0 0.0
    %194 = vmatpush.msra.mxu0 0.0
    %195 = vmatpush.msra.mxu0 0.0
    %196 = vmatpush.msra.mxu0 0.0
    %197 = vmatpush.msra.mxu0 0.0
    %198 = vmatpush.msra.mxu0 0.0
    %199 = vmatpush.msra.mxu0 0.0
    %200 = vmatpush.msra.mxu0 0.0
    %201 = vmatpush.msra.mxu0 0.0
    %202 = vmatpush.msra.mxu0 0.0
    %203 = vmatpush.msra.mxu0 0.0
    %204 = vmatpush.msra.mxu0 %v184
    %205 = vmatmul.f32.gmra.mxu0 %v187
    %v206 = vpop.f32.mrf.mxu0
    %v207 = vadd.f32 0.0, %v206
    %208 = vdwg.mxu0
    %v209 = vperm.slane %v207, 0
    %v210 = vsub.f32 %v127, %v209
    %v211 = vsub.f32 %v130, %v209
    %v212 = vsub.f32 %v133, %v209
    %v213 = vsub.f32 %v136, %v209
    %v214 = vmul.f32 %v210, %v210
    %v215 = vmul.f32 %v211, %v211
    %v216 = vmul.f32 %v212, %v212
    %v217 = vmul.f32 %v213, %v213
    %v218 = vadd.f32 %v214, %v215
    %v219 = vadd.f32 %v218, %v216
    %v220 = vadd.f32 %v219, %v217
    %v221 = vrot.slane %v220, 4
    %v222 = vadd.f32 %v220, %v221
    %v223 = vrot.slane %v222, 2
    %v224 = vadd.f32 %v222, %v223
    %v225 = vrot.slane %v224, 1
    %v226 = vadd.f32 %v224, %v225
    %227 = vmatpush.msra.mxu0 %v162
    %228 = vmatpush.msra.mxu0 %v161
    %229 = vmatpush.msra.mxu0 %v160
    %230 = vmatpush.msra.mxu0 %v159
    %231 = vmatpush.msra.mxu0 %v158
    %232 = vmatpush.msra.mxu0 %v157
    %233 = vmatpush.msra.mxu0 %v156
    %234 = vmatpush.msra.mxu0 %v155
    %235 = vmatpush.msra.mxu0 %v154
    %236 = vmatpush.msra.mxu0 %v153
    %237 = vmatpush.msra.mxu0 %v152
    %238 = vmatpush.msra.mxu0 %v151
    %239 = vmatpush.msra.mxu0 %v150
    %240 = vmatpush.msra.mxu0 %v149
    %241 = vmatpush.msra.mxu0 %v148
    %242 = vmatpush.msra.mxu0 %v147
    %243 = vmatmul.f32.gmra.mxu0 %v226
    %v244 = vpop.f32.mrf.mxu0
    %v245 = vadd.f32 0.0, %v244
    %246 = vdwg.mxu0
    %v247 = vmul.f32 %v245, 0.001953125
    %v248 = vld [vmem:[%s3] sm:$0x1]
    %v249 = vadd.f32 %v247, 1e-05
    %v250 = vrsqrt.pop %v249
    %v251 = vmul.f32 %v250, %v249
    %v252 = vmul.f32 %v251, %v250
    %v253 = vmul.f32 0.5, %v252
    %v254 = vsub.f32 1.5, %v253
    %v255 = vmul.f32 %v250, %v254
    %vm256 = vweird.f32 %v249
    %vm257 = vweird.f32 %v250
    %vm258 = vmor %vm256, %vm257
    %v259 = vsel %vm258, %v250, %v255
    %v260 = vmul.f32 %v248, %v259
    %v262 = vsel %vm185, %v260, 0
    %264 = vmatpush.msra.mxu0 0.0
    %265 = vmatpush.msra.mxu0 0.0
    %266 = vmatpush.msra.mxu0 0.0
    %267 = vmatpush.msra.mxu0 0.0
    %268 = vmatpush.msra.mxu0 0.0
    %269 = vmatpush.msra.mxu0 0.0
    %270 = vmatpush.msra.mxu0 0.0
    %271 = vmatpush.msra.mxu0 0.0
    %272 = vmatpush.msra.mxu0 0.0
    %273 = vmatpush.msra.mxu0 0.0
    %274 = vmatpush.msra.mxu0 0.0
    %275 = vmatpush.msra.mxu0 0.0
    %276 = vmatpush.msra.mxu0 0.0
    %277 = vmatpush.msra.mxu0 0.0
    %278 = vmatpush.msra.mxu0 0.0
    %279 = vmatpush.msra.mxu0 %v184
    %280 = vmatmul.f32.gmra.mxu0 %v262
    %v281 = vpop.f32.mrf.mxu0
    %v282 = vadd.f32 0.0, %v281
    %283 = vdwg.mxu0
    %v284 = vld [vmem:[%s4] sm:$0x1]
    %v286 = vsel %vm185, %v284, 0
    %288 = vmatpush.msra.mxu0 0.0
    %289 = vmatpush.msra.mxu0 0.0
    %290 = vmatpush.msra.mxu0 0.0
    %291 = vmatpush.msra.mxu0 0.0
    %292 = vmatpush.msra.mxu0 0.0
    %293 = vmatpush.msra.mxu0 0.0
    %294 = vmatpush.msra.mxu0 0.0
    %295 = vmatpush.msra.mxu0 0.0
    %296 = vmatpush.msra.mxu0 0.0
    %297 = vmatpush.msra.mxu0 0.0
    %298 = vmatpush.msra.mxu0 0.0
    %299 = vmatpush.msra.mxu0 0.0
    %300 = vmatpush.msra.mxu0 0.0
    %301 = vmatpush.msra.mxu0 0.0
    %302 = vmatpush.msra.mxu0 0.0
    %303 = vmatpush.msra.mxu0 %v184
    %304 = vmatmul.f32.gmra.mxu0 %v286
    %v305 = vpop.f32.mrf.mxu0
    %v306 = vadd.f32 0.0, %v305
    %307 = vdwg.mxu0
    %v308 = vperm.slane %v282, 0
    %v309 = vmul.f32 %v210, %v308
    %v310 = vmul.f32 %v211, %v308
    %v311 = vmul.f32 %v212, %v308
    %v312 = vmul.f32 %v213, %v308
    %v313 = vperm.slane %v306, 0
    %v314 = vadd.f32 %v309, %v313
    %v315 = vadd.f32 %v310, %v313
    %v316 = vadd.f32 %v311, %v313
    %v317 = vadd.f32 %v312, %v313
    %v318 = vmax.f32 %v314, 0.0
    %v319 = vmax.f32 %v315, 0.0
    %v320 = vmax.f32 %v316, 0.0
    %v321 = vmax.f32 %v317, 0.0
    %v322 = vld [vmem:[%s7] sm:$0xff]
    %v323 = vld [vmem:[%s7 + $0x8] sm:$0xff]
    %v324 = vld [vmem:[%s7 + $0x10] sm:$0xff]
    %v325 = vld [vmem:[%s7 + $0x18] sm:$0xff]
    %327 = vset.pattern.permute.xlu0 0
    %328 = vperm.xlu0 %327, %v322
    %v329 = vpop.permute.xlu0 %328
    %332 = vset.pattern.permute.xlu0 0
    %333 = vperm.xlu0 %332, %v323
    %v334 = vpop.permute.xlu0 %333
    %337 = vset.pattern.permute.xlu0 0
    %338 = vperm.xlu0 %337, %v324
    %v339 = vpop.permute.xlu0 %338
    %342 = vset.pattern.permute.xlu0 0
    %343 = vperm.xlu0 %342, %v325
    %v344 = vpop.permute.xlu0 %343
    %v346 = vmul.f32 %v318, %v329
    %v347 = vmul.f32 %v319, %v334
    %v348 = vmul.f32 %v320, %v339
    %v349 = vmul.f32 %v321, %v344
    %v350 = vld [vmem:[%s8] sm:$0xff]
    %v351 = vld [vmem:[%s8 + $0x8] sm:$0xff]
    %v352 = vld [vmem:[%s8 + $0x10] sm:$0xff]
    %v353 = vld [vmem:[%s8 + $0x18] sm:$0xff]
    %v354 = vld [vmem:[%s8 + $0x20] sm:$0xff]
    %v355 = vld [vmem:[%s8 + $0x28] sm:$0xff]
    %v356 = vld [vmem:[%s8 + $0x30] sm:$0xff]
    %v357 = vld [vmem:[%s8 + $0x38] sm:$0xff]
    %v358 = vld [vmem:[%s8 + $0x40] sm:$0xff]
    %v359 = vld [vmem:[%s8 + $0x48] sm:$0xff]
    %v360 = vld [vmem:[%s8 + $0x50] sm:$0xff]
    %v361 = vld [vmem:[%s8 + $0x58] sm:$0xff]
    %v362 = vld [vmem:[%s8 + $0x60] sm:$0xff]
    %v363 = vld [vmem:[%s8 + $0x68] sm:$0xff]
    %v364 = vld [vmem:[%s8 + $0x70] sm:$0xff]
    %v365 = vld [vmem:[%s8 + $0x78] sm:$0xff]
    %366 = vmatpush.msra.mxu0 %v365
    %367 = vmatpush.msra.mxu0 %v364
    %368 = vmatpush.msra.mxu0 %v363
    %369 = vmatpush.msra.mxu0 %v362
    %370 = vmatpush.msra.mxu0 %v361
    %371 = vmatpush.msra.mxu0 %v360
    %372 = vmatpush.msra.mxu0 %v359
    %373 = vmatpush.msra.mxu0 %v358
    %374 = vmatpush.msra.mxu0 %v357
    %375 = vmatpush.msra.mxu0 %v356
    %376 = vmatpush.msra.mxu0 %v355
    %377 = vmatpush.msra.mxu0 %v354
    %378 = vmatpush.msra.mxu0 %v353
    %379 = vmatpush.msra.mxu0 %v352
    %380 = vmatpush.msra.mxu0 %v351
    %381 = vmatpush.msra.mxu0 %v350
    %382 = vmatmul.f32.gmra.mxu0 %v346
    %v383 = vpop.f32.mrf.mxu0
    %v384 = vadd.f32 0.0, %v383
    %385 = vmatmul.f32.gmra.mxu0 %v347
    %v386 = vpop.f32.mrf.mxu0
    %v387 = vadd.f32 0.0, %v386
    %388 = vmatmul.f32.gmra.mxu0 %v348
    %v389 = vpop.f32.mrf.mxu0
    %v390 = vadd.f32 0.0, %v389
    %391 = vmatmul.f32.gmra.mxu0 %v349
    %v392 = vpop.f32.mrf.mxu0
    %v393 = vadd.f32 0.0, %v392
    %394 = vdwg.mxu0
    %v395 = vsel %vm185, %v384, 0.0
    %v396 = vsel %vm185, %v387, 0.0
    %v397 = vadd.f32 %v395, %v396
    %v398 = vrot.slane %v397, 4
    %v399 = vadd.f32 %v397, %v398
    %v400 = vrot.slane %v399, 2
    %v401 = vadd.f32 %v399, %v400
    %v402 = vrot.slane %v401, 1
    %v403 = vadd.f32 %v401, %v402
    %v404 = vsel %vm185, %v390, 0.0
    %v405 = vsel %vm185, %v393, 0.0
    %v406 = vadd.f32 %v404, %v405
    %v407 = vrot.slane %v406, 4
    %v408 = vadd.f32 %v406, %v407
    %v409 = vrot.slane %v408, 2
    %v410 = vadd.f32 %v408, %v409
    %v411 = vrot.slane %v410, 1
    %v412 = vadd.f32 %v410, %v411
    %v413 = vld [vmem:[%s9] sm:$0x1]
    %v415 = vperm.slane %v413, 0
    %v417 = vadd.f32 %v403, %v415
    %v418 = vadd.f32 %v412, %v415
    %v421 = vrot.slane %v418, 7
    %vm422 = vcmask 1041409
    %v423 = vsel %vm422, %v421, %v417
    %vm425 = vcmask 58368
    %426 = vst.msk [vmem:[#allocation2] sm:$0x3] %vm425, %v423
    // Predicated region
    $region42: #{dprior_forward.1} parent=1 // pred_check
      _
    $region43: #{dprior_forward.1} parent=1 // pred_check_branch
      %428 = sbr.rel (0) target = $region45
    $region44: #{dprior_forward.1} parent=1 // pred_region
      %430 = vsyncadd [#allocation3], 0
      %s432 = sshll.u32 [#allocation2], 4
      %s433 = int_to_ptr.vmem [resolvable:$true] %s432
      %s434 = sshll.u32 %s10, 4
      %s435 = int_to_ptr.hbm [resolvable:$true] %s434
      %437 = dma.vmem_to_hbm [thread:$0]  %s433, 32, %s435, [#allocation3]
    $region45: #{dprior_forward.1} parent=1 // pred_fallthru
      _
    // Predicated region
    $region46: #{dprior_forward.1} parent=1 // pred_check
      _
    $region47: #{dprior_forward.1} parent=1 // pred_check_branch
      %439 = sbr.rel (0) target = $region49
    $region48: #{dprior_forward.1} parent=1 // pred_region
      %441 = dma.done [#allocation3], 32
    $region49: #{dprior_forward.1} parent=1 // pred_fallthru
      _
    %442 = vsyncpa [#allocation3], 1

</llo_original>
